<compile_context>
chip_gen: v7x
topology: tpu7x:2x2x1
jax: 0.10.0
libtpu: 0.0.40
codegen_flags: <defaults>
</compile_context>

<pallas_src>
import functools

import jax
import jax.numpy as jnp
from jax import lax
from jax.experimental import pallas as pl
from jax.experimental.pallas import tpu as pltpu

# ----------------------------- config (args_config equivalents) -------------
EMB_SIZE = 64          # args_config.dim
N_NEGS = 8             # args_config.n_negs
DECAY = 1e-4           # args_config.l2
TEMPERATURE_1 = 0.10   # args_config.temperature
U_NORM = True          # args_config.u_norm
I_NORM = True          # args_config.i_norm
# TODO(synk): mess_dropout (nn.Dropout) not applied -- forward run in eval mode.

NORM_EPS = 1e-12       # F.normalize eps
LANES = 128            # lane width / dot-block width
MAX_TILE_B = 1024      # batch-tile cap (VMEM-budgeted; safe on v7x's 64 MiB)


def _round_up(x, m):
    return ((x + m - 1) // m) * m


def _mf_kernel(s_ref, all_ref, y_ref, stats_ref, *,
               u_norm, i_norm, temp, n_valid, tile_b, emb_dim, n_items):
    """One batch tile (everything lane-dense).

    s_ref    : (Fp, 128)   bf16  segment-selection matrix, S[c, j] = (c // D == j)
    all_ref  : (TB, Fp)    bf16  packed row = [user | pos | neg_0 .. neg_{N-1}]
    y_ref    : (TB, 128)   bf16  dots; col 0 = <u,u>, cols 1..1+N = y_pred
    stats_ref: (1, 8, 128) f32   [0,0,0] = reg partial, [0,0,1] = loss partial
    """
    i = pl.program_id(0)
    S = s_ref[...]                                     # (Fp, 128) bf16
    xb = all_ref[...]                                  # (TB, Fp)  bf16
    tb, fp = xb.shape

    # ---- per-segment sum of squares on the MXU: s1[:, j] = ||seg_j||^2 ------
    # bf16 per-term products, exact f32 accumulation (precision note in header)
    s1 = jnp.dot(xb * xb, S, preferred_element_type=jnp.float32)   # (TB, 128)

    # ---- raw dots <seg_j, user> on the MXU ----------------------------------
    # replicate the user segment across all Fp lanes with lane-doubling concats
    u_rep = xb[:, :emb_dim]
    while u_rep.shape[1] < fp:
        u_rep = jnp.concatenate([u_rep, u_rep], axis=1)
    u_rep = u_rep[:, :fp]
    y_raw = jnp.dot(xb * u_rep, S, preferred_element_type=jnp.float32)  # (TB,128)

    # ---- valid-row mask (tail tile is zero-padded) --------------------------
    rows = i * tile_b + lax.broadcasted_iota(jnp.int32, (tb, 1), 0)
    validf = (rows < n_valid).astype(jnp.float32)      # (TB, 1)

    # regularize = (||u||^2 + ||pos||^2 + ||negs||^2) / 2  (pre-normalization;
    # columns >= M of s1 are exactly zero because S has zero columns there)
    reg = 0.5 * jnp.sum(s1 * validf)

    # ---- F.normalize applied post-hoc on the (TB,128) dot block -------------
    # x / max(||x||, eps)  ==  x * rsqrt(max(||x||^2, eps^2))
    inv = lax.rsqrt(jnp.maximum(s1, NORM_EPS * NORM_EPS))   # (TB, 128)
    y = y_raw
    if i_norm:
        y = y * inv              # column j scaled by 1/||seg_j||
    if u_norm:
        y = y * inv[:, 0:1]      # every column scaled by 1/||user||

    # lane-dense bf16 writeback (cols >= 1+n_items are exactly zero)
    y_ref[...] = y.astype(y_ref.dtype)

    # TODO(synk): losses.BSL is external (not provided); surrogate is the
    # standard temperature-scaled softmax CE with the positive at column 1.
    lane = lax.broadcasted_iota(jnp.int32, (tb, LANES), 1)
    item_mask = (lane >= 1) & (lane <= n_items)        # lanes 1..1+N
    logits = jnp.where(item_mask, y * (1.0 / temp), -1e30)
    mx = jnp.max(logits, axis=-1, keepdims=True)
    lse = mx + jnp.log(jnp.sum(jnp.exp(logits - mx), axis=-1, keepdims=True))
    loss = jnp.sum((lse - logits[:, 1:2]) * validf)

    # per-tile partials -> lane-dense stats block (reduced in the wrapper)
    lane3 = lax.broadcasted_iota(jnp.int32, (1, 8, LANES), 2)
    stats_ref[...] = jnp.where(lane3 == 0, reg,
                               jnp.where(lane3 == 1, loss, 0.0))


def mf_frame_forward(user_embed, item_embed, users, pos_items, neg_items,
                     *, tile_b=None, emb_dtype=jnp.bfloat16):
    """Mirrors mf_frame.forward -> Uniform_loss.

    Returns (loss + emb_loss, emb_loss, y_pred).
    """
    # ---- glue: embedding gathers (PyTorch tensor indexing); bf16 stream -----
    # The feature-axis concat lets XLA fuse gather + pack into one pass that
    # writes the lane-dense (B, M*D) stream directly (no 3D relayout pass).
    u_e = user_embed[users].astype(emb_dtype)            # (B, D)
    pos_e = item_embed[pos_items].astype(emb_dtype)      # (B, D)
    neg_e = item_embed[neg_items].astype(emb_dtype)      # (B, N, D)

    B, D = u_e.shape
    N = neg_e.shape[1]
    M = 2 + N                       # user + pos + negs segments per row
    assert M <= LANES and 1 + N < LANES
    F = M * D
    Fp = _round_up(F, LANES)        # lane-dense feature width (640 for D=64,N=8)

    all_e = jnp.concatenate([u_e, pos_e, neg_e.reshape(B, N * D)], axis=-1)
    if Fp != F:
        all_e = jnp.pad(all_e, ((0, 0), (0, Fp - F)))

    # segment-selection matrix: S[c, j] = 1 iff feature c belongs to segment j
    c = jnp.arange(Fp, dtype=jnp.int32)[:, None]
    j = jnp.arange(LANES, dtype=jnp.int32)[None, :]
    S = ((c // D == j) & (c < F)).astype(emb_dtype)       # (Fp, 128)

    # ---- batch tiling: <=1024-row tiles, even count (v7x megacore balance) ---
    if tile_b is None:
        n_tiles = max(2, 2 * pl.cdiv(B, 2 * MAX_TILE_B))
        TB = _round_up(pl.cdiv(B, n_tiles), 16)
    else:
        TB = max(16, _round_up(tile_b, 16))
        n_tiles = pl.cdiv(B, TB)
    B_pad = n_tiles * TB
    if B_pad != B:
        all_e = jnp.pad(all_e, ((0, B_pad - B), (0, 0)))

    kernel = functools.partial(
        _mf_kernel, u_norm=U_NORM, i_norm=I_NORM, temp=TEMPERATURE_1,
        n_valid=B, tile_b=TB, emb_dim=D, n_items=1 + N)

    itemsize = jnp.dtype(emb_dtype).itemsize
    bytes_in = B_pad * Fp * itemsize + Fp * LANES * itemsize
    bytes_out = B_pad * LANES * 2 + n_tiles * 8 * LANES * 4
    cost = pl.CostEstimate(
        flops=int(2 * (2 * B_pad * Fp * LANES) + 4 * B_pad * Fp),  # 2 MXU + VPU
        transcendentals=int(B_pad * (M + N + 3)),                  # rsqrt+exp+log
        bytes_accessed=int(bytes_in + bytes_out))

    y_pad, stats = pl.pallas_call(
        kernel,
        out_shape=(
            jax.ShapeDtypeStruct((B_pad, LANES), jnp.bfloat16),      # dots (lane-padded)
            jax.ShapeDtypeStruct((n_tiles, 8, LANES), jnp.float32),  # per-tile partials
        ),
        grid_spec=pltpu.PrefetchScalarGridSpec(
            num_scalar_prefetch=0,
            grid=(n_tiles,),
            in_specs=[
                pl.BlockSpec((Fp, LANES), lambda i: (0, 0)),   # S: resident constant
                pl.BlockSpec((TB, Fp), lambda i: (i, 0)),      # packed bf16 stream
            ],
            out_specs=[
                pl.BlockSpec((TB, LANES), lambda i: (i, 0)),
                pl.BlockSpec((1, 8, LANES), lambda i: (i, 0, 0)),
            ],
        ),
        compiler_params=pltpu.CompilerParams(
            dimension_semantics=("parallel",),
            vmem_limit_bytes=40 << 20),
        cost_estimate=cost,
    )(S, all_e)

    # col 0 is <u,u>; cols 1..1+N are [pos | negs] = y_pred
    y_pred = y_pad[:B, 1:2 + N].astype(jnp.float32)
    regularize = jnp.sum(stats[:, 0, 0])
    loss = jnp.sum(stats[:, 0, 1]) / B             # mean over batch (surrogate BSL)
    emb_loss = DECAY * regularize / B
    return loss + emb_loss, emb_loss, y_pred


def xavier_uniform(key, shape):
    fan_in, fan_out = shape[0], shape[1]
    bound = jnp.sqrt(6.0 / (fan_in + fan_out))
    return jax.random.uniform(key, shape, jnp.float32, -bound, bound)


if __name__ == "__main__":
    key = jax.random.PRNGKey(0)
    k_u, k_i, k_bu, k_bp, k_bn = jax.random.split(key, 5)

    n_users, n_items = 64, 128
    batch_size = 8

    # deterministic "parameters" (module's _init_weight: xavier_uniform_)
    user_embed = xavier_uniform(k_u, (n_users, EMB_SIZE))
    item_embed = xavier_uniform(k_i, (n_items, EMB_SIZE))

    # deterministic batch (batch['users'], batch['pos_items'], batch['neg_items'])
    users = jax.random.randint(k_bu, (batch_size,), 0, n_users)
    pos_items = jax.random.randint(k_bp, (batch_size,), 0, n_items)
    neg_items = jax.random.randint(k_bn, (batch_size, N_NEGS), 0, n_items)

    total_loss, emb_loss, y_pred = mf_frame_forward(
        user_embed, item_embed, users, pos_items, neg_items)

    jax.block_until_ready((total_loss, emb_loss, y_pred))
    assert y_pred.shape == (batch_size, 1 + N_NEGS)
    assert jnp.isfinite(total_loss) and jnp.isfinite(emb_loss)
    assert bool(jnp.all(jnp.isfinite(y_pred)))
    print("KERNEL_OK")
</pallas_src>

<mosaic_0001>
module attributes {stable_mosaic.version = 11 : i64} {
  func.func @_mf_kernel(%arg0: i32, %arg1: memref<640x128xbf16, #tpu.memory_space<vmem>>, %arg2: memref<16x640xbf16, #tpu.memory_space<vmem>>, %arg3: memref<16x128xbf16, #tpu.memory_space<vmem>>, %arg4: memref<1x8x128xf32, #tpu.memory_space<vmem>>) attributes {dimension_semantics = [#tpu.dimension_semantics<parallel>], iteration_bounds = array<i64: 2>, scalar_prefetch = 0 : i64, scratch_operands = 0 : i64, tpu.core_type = #tpu.core_type<tc>, window_params = [{pipeline_mode = #tpu.pipeline_mode<synchronous>, transform_indices = @transform_0, window_bounds = array<i64: 640, 128>}, {transform_indices = @transform_1, window_bounds = array<i64: 16, 640>}, {transform_indices = @transform_2, window_bounds = array<i64: 16, 128>}, {transform_indices = @transform_3, window_bounds = array<i64: 1, 8, 128>}]} {
    %c0 = arith.constant 0 : index
    %c0_0 = arith.constant 0 : index
    %0 = vector.load %arg1[%c0, %c0_0] : memref<640x128xbf16, #tpu.memory_space<vmem>>, vector<640x128xbf16>
    %c0_1 = arith.constant 0 : index
    %c0_2 = arith.constant 0 : index
    %1 = vector.load %arg2[%c0_1, %c0_2] : memref<16x640xbf16, #tpu.memory_space<vmem>>, vector<16x640xbf16>
    %2 = arith.mulf %1, %1 : vector<16x640xbf16>
    %cst = arith.constant dense<0.000000e+00> : vector<16x128xf32>
    %3 = tpu.matmul %2, %0, %cst {dimension_numbers = #tpu.dot_dimension_numbers<[1], [0], [0], [1], [0, 0, 1, 1], [], []>} : vector<16x640xbf16>, vector<640x128xbf16>, vector<16x128xf32> -> vector<16x128xf32>
    %4 = vector.extract_strided_slice %1 {offsets = [0, 0], sizes = [16, 64], strides = [1, 1]} : vector<16x640xbf16> to vector<16x64xbf16>
    %5 = tpu.concatenate %4, %4 in 1 : vector<16x64xbf16>, vector<16x64xbf16> -> vector<16x128xbf16>
    %6 = tpu.concatenate %5, %5 in 1 : vector<16x128xbf16>, vector<16x128xbf16> -> vector<16x256xbf16>
    %7 = tpu.concatenate %6, %6 in 1 : vector<16x256xbf16>, vector<16x256xbf16> -> vector<16x512xbf16>
    %8 = tpu.concatenate %7, %7 in 1 : vector<16x512xbf16>, vector<16x512xbf16> -> vector<16x1024xbf16>
    %9 = vector.extract_strided_slice %8 {offsets = [0, 0], sizes = [16, 640], strides = [1, 1]} : vector<16x1024xbf16> to vector<16x640xbf16>
    %10 = arith.mulf %1, %9 : vector<16x640xbf16>
    %cst_3 = arith.constant dense<0.000000e+00> : vector<16x128xf32>
    %11 = tpu.matmul %10, %0, %cst_3 {dimension_numbers = #tpu.dot_dimension_numbers<[1], [0], [0], [1], [0, 0, 1, 1], [], []>} : vector<16x640xbf16>, vector<640x128xbf16>, vector<16x128xf32> -> vector<16x128xf32>
    %c16_i32 = arith.constant 16 : i32
    %12 = arith.muli %arg0, %c16_i32 : i32
    %13 = tpu.iota {dimensions = array<i32: 0>} : vector<16x1xi32>
    %14 = vector.broadcast %12 : i32 to vector<16x1xi32>
    %15 = arith.addi %14, %13 : vector<16x1xi32>
    %c8_i32 = arith.constant 8 : i32
    %16 = vector.broadcast %c8_i32 : i32 to vector<16x1xi32>
    %17 = arith.cmpi slt, %15, %16 : vector<16x1xi32>
    %18 = arith.extui %17 : vector<16x1xi1> to vector<16x1xi32>
    %19 = arith.sitofp %18 : vector<16x1xi32> to vector<16x1xf32>
    %20 = vector.broadcast %19 : vector<16x1xf32> to vector<16x128xf32>
    %21 = arith.mulf %3, %20 : vector<16x128xf32>
    %22 = vector.shape_cast %21 : vector<16x128xf32> to vector<1x16x128xf32>
    %cst_4 = arith.constant dense<0.000000e+00> : vector<1xf32>
    %23 = vector.multi_reduction <add>, %22, %cst_4 [1, 2] : vector<1x16x128xf32> to vector<1xf32>
    %24 = vector.shape_cast %23 : vector<1xf32> to vector<1x1x1xf32>
    %25 = vector.extract %24[0, 0, 0] : f32 from vector<1x1x1xf32>
    %cst_5 = arith.constant 5.000000e-01 : f32
    %26 = arith.mulf %cst_5, %25 : f32
    %cst_6 = arith.constant 1.000000e-24 : f32
    %27 = vector.broadcast %cst_6 : f32 to vector<16x128xf32>
    %28 = arith.maximumf %3, %27 : vector<16x128xf32>
    %29 = math.rsqrt %28 : vector<16x128xf32>
    %30 = arith.mulf %11, %29 : vector<16x128xf32>
    %31 = vector.extract_strided_slice %29 {offsets = [0, 0], sizes = [16, 1], strides = [1, 1]} : vector<16x128xf32> to vector<16x1xf32>
    %32 = vector.broadcast %31 : vector<16x1xf32> to vector<16x128xf32>
    %33 = arith.mulf %30, %32 : vector<16x128xf32>
    %34 = arith.truncf %33 : vector<16x128xf32> to vector<16x128xbf16>
    %c0_7 = arith.constant 0 : index
    %c0_8 = arith.constant 0 : index
    %35 = vector.load %arg3[%c0_7, %c0_8] : memref<16x128xbf16, #tpu.memory_space<vmem>>, vector<16x128xbf16>
    tpu.vector_store %arg3[%c0_7, %c0_8], %34 {strides = array<i32>} : memref<16x128xbf16, #tpu.memory_space<vmem>>, vector<16x128xbf16>,
    %36 = tpu.iota {dimensions = array<i32: 1>} : vector<16x128xi32>
    %c1_i32 = arith.constant 1 : i32
    %37 = vector.broadcast %c1_i32 : i32 to vector<16x128xi32>
    %38 = arith.cmpi sge, %36, %37 : vector<16x128xi32>
    %c9_i32 = arith.constant 9 : i32
    %39 = vector.broadcast %c9_i32 : i32 to vector<16x128xi32>
    %40 = arith.cmpi sle, %36, %39 : vector<16x128xi32>
    %41 = arith.andi %38, %40 : vector<16x128xi1>
    %cst_9 = arith.constant 1.000000e+01 : f32
    %42 = vector.broadcast %cst_9 : f32 to vector<16x128xf32>
    %43 = arith.mulf %33, %42 : vector<16x128xf32>
    %cst_10 = arith.constant -1.000000e+30 : f32
    %44 = vector.broadcast %cst_10 : f32 to vector<16x128xf32>
    %45 = arith.select %41, %43, %44 : vector<16x128xi1>, vector<16x128xf32>
    %cst_11 = arith.constant dense<0xFF800000> : vector<16xf32>
    %46 = vector.multi_reduction <maximumf>, %45, %cst_11 [1] : vector<16x128xf32> to vector<16xf32>
    %47 = vector.shape_cast %46 : vector<16xf32> to vector<16x1xf32>
    %48 = vector.broadcast %47 : vector<16x1xf32> to vector<16x128xf32>
    %49 = arith.subf %45, %48 : vector<16x128xf32>
    %50 = math.exp %49 : vector<16x128xf32>
    %cst_12 = arith.constant dense<0.000000e+00> : vector<16xf32>
    %51 = vector.multi_reduction <add>, %50, %cst_12 [1] : vector<16x128xf32> to vector<16xf32>
    %52 = vector.shape_cast %51 : vector<16xf32> to vector<16x1xf32>
    %53 = math.log %52 : vector<16x1xf32>
    %54 = arith.addf %47, %53 : vector<16x1xf32>
    %55 = vector.extract_strided_slice %45 {offsets = [0, 1], sizes = [16, 1], strides = [1, 1]} : vector<16x128xf32> to vector<16x1xf32>
    %56 = arith.subf %54, %55 : vector<16x1xf32>
    %57 = arith.mulf %56, %19 : vector<16x1xf32>
    %58 = vector.shape_cast %57 : vector<16x1xf32> to vector<1x16x1xf32>
    %cst_13 = arith.constant dense<0.000000e+00> : vector<1xf32>
    %59 = vector.multi_reduction <add>, %58, %cst_13 [1, 2] : vector<1x16x1xf32> to vector<1xf32>
    %60 = vector.shape_cast %59 : vector<1xf32> to vector<1x1x1xf32>
    %61 = vector.extract %60[0, 0, 0] : f32 from vector<1x1x1xf32>
    %62 = tpu.iota {dimensions = array<i32: 2>} : vector<1x8x128xi32>
    %c0_i32 = arith.constant 0 : i32
    %63 = vector.broadcast %c0_i32 : i32 to vector<1x8x128xi32>
    %64 = arith.cmpi eq, %62, %63 : vector<1x8x128xi32>
    %c1_i32_14 = arith.constant 1 : i32
    %65 = vector.broadcast %c1_i32_14 : i32 to vector<1x8x128xi32>
    %66 = arith.cmpi eq, %62, %65 : vector<1x8x128xi32>
    %cst_15 = arith.constant 0.000000e+00 : f32
    %67 = vector.broadcast %61 : f32 to vector<1x8x128xf32>
    %68 = vector.broadcast %cst_15 : f32 to vector<1x8x128xf32>
    %69 = arith.select %66, %67, %68 : vector<1x8x128xi1>, vector<1x8x128xf32>
    %70 = vector.broadcast %26 : f32 to vector<1x8x128xf32>
    %71 = arith.select %64, %70, %69 : vector<1x8x128xi1>, vector<1x8x128xf32>
    %c0_16 = arith.constant 0 : index
    %c0_17 = arith.constant 0 : index
    %c0_18 = arith.constant 0 : index
    %72 = vector.load %arg4[%c0_16, %c0_17, %c0_18] : memref<1x8x128xf32, #tpu.memory_space<vmem>>, vector<1x8x128xf32>
    tpu.vector_store %arg4[%c0_16, %c0_17, %c0_18], %71 {strides = array<i32>} : memref<1x8x128xf32, #tpu.memory_space<vmem>>, vector<1x8x128xf32>,
    return
  }
  func.func @transform_0(%arg0: i32) -> (i32, i32) {
    %c0_i32 = arith.constant 0 : i32
    %c0_i32_0 = arith.constant 0 : i32
    %c0_i32_1 = arith.constant 0 : i32
    return %c0_i32, %c0_i32_0 : i32, i32
  }
  func.func @transform_1(%arg0: i32) -> (i32, i32) {
    %c0_i32 = arith.constant 0 : i32
    %c0_i32_0 = arith.constant 0 : i32
    return %arg0, %c0_i32 : i32, i32
  }
  func.func @transform_2(%arg0: i32) -> (i32, i32) {
    %c0_i32 = arith.constant 0 : i32
    %c0_i32_0 = arith.constant 0 : i32
    return %arg0, %c0_i32 : i32, i32
  }
  func.func @transform_3(%arg0: i32) -> (i32, i32, i32) {
    %c0_i32 = arith.constant 0 : i32
    %c0_i32_0 = arith.constant 0 : i32
    %c0_i32_1 = arith.constant 0 : i32
    return %arg0, %c0_i32, %c0_i32_0 : i32, i32, i32
  }
}

</mosaic_0001>

<llo_original>
// kernel: tpu_custom_call.1
$region0: #{tpu_custom_call.1}
  #allocation0 [shape = 'u32[]', space=smem, size = 0x4, offset = 0x4, fixed_abs, tag = 'smem constant byte address 0x4 - core index']
  #allocation1 [shape = 'u32[144,128]{1,0:T(1,128)}', space=vmem, size = 0x12000, scoped, tag = 'internal scratch']
  %s0 = inlined_call_operand.hbm [shape: bf16[640,128], index: 0, kind: input, shape index: {}]
  %s1 = inlined_call_operand.hbm [shape: bf16[32,640], index: 1, kind: input, shape index: {}]
  %s2 = inlined_call_operand.hbm [shape: bf16[32,128], index: 2, kind: output, shape index: {0}]
  %s3 = inlined_call_operand.hbm [shape: f32[2,8,128], index: 3, kind: output, shape index: {1}]
  %4 = xla_tuple %s2, %s3
  %s5 = sld [smem:[#allocation0]]
  $region57: #{tpu_custom_call.1} parent=0
    _
  %s7 = ssub.s32 1, %s5
  %s8 = scalar_select 0, %s7, %s5
  $region1: #{tpu_custom_call.1} parent=0
    #allocation2 [shape = 'u8[163840]{0}', space=vmem, size = 0x28000, scoped, tag = 'input window, operand 0, single buffered']
    #allocation3 [shape = 's32[2]{0}', space=sflag, size = 0x8, scoped, tag = 'scoped memory for tpu_custom_call.1']
    #allocation4 [shape = 's32[2]{0}', space=sflag, size = 0x8, scoped, tag = 'scoped memory for tpu_custom_call.1']
    #allocation5 [shape = 'u8[40960]{0}', space=vmem, size = 0xa000, scoped, tag = 'input window, operand 1']
    #allocation6 [shape = 's32[2]{0}', space=sflag, size = 0x8, scoped, tag = 'scoped memory for tpu_custom_call.1']
    #allocation7 [shape = 'u8[8192]{0}', space=vmem, size = 0x2000, scoped, tag = 'output window, operand 0']
    #allocation8 [shape = 'u8[8192]{0}', space=vmem, size = 0x2000, scoped, tag = 'output window, operand 1']
    #allocation9 [shape = 's32[2]{0}', space=sflag, size = 0x8, scoped, tag = 'scoped memory for tpu_custom_call.1']
    %9 = vsyncpa [#allocation3], 0
    %10 = vsyncpa [#allocation6], 0
    %s11 = scalar_lea.sflag [#allocation6], 1
    %12 = vsyncpa %s11, 0
    %13 = vsyncpa [#allocation4], 0
    %s14 = scalar_lea.sflag [#allocation4], 1
    %15 = vsyncpa %s14, 0
    %16 = vsyncpa [#allocation9], 0
    %s17 = scalar_lea.sflag [#allocation9], 1
    %18 = vsyncpa %s17, 0
    loop: start=0, step=1, limit=4
    $region2: #{tpu_custom_call.1} parent=1 // loop_pre_header
      _
    $region3: #{tpu_custom_call.1} parent=1 // loop_header
      %s20 = sphi 0, %s24
      %p21 = scmp.ge.s32.totalorder %s20, 4
      %s28 = sphi 0, %s28
      %s30 = sphi 0, %s28
      %s31 = sphi 0, %s30
      %s45 = sphi 0, %s31
      %s51 = sphi 0, %s53
      %s54 = sphi 0, %s51
      %s55 = sphi 0, %s54
      %s71 = sphi 0, %s55
      %s77 = sphi 0, %s79
      %s80 = sphi 0, %s77
      %s81 = sphi 0, %s80
      %s97 = sphi 0, %s81
      %s103 = sphi 0, %s105
      %s106 = sphi 0, %s103
      %s107 = sphi 0, %s106
      %s123 = sphi 0, %s107
    $region4: #{tpu_custom_call.1} parent=1 // loop_header_branch
      %23 = sbr.rel (%p21) target = $region8
    $region5: #{tpu_custom_call.1} parent=1 // loop_body
      %s25 = ssub.s32 %s20, 1
      %s26 = ssub.s32 %s20, 2
      %s27 = sadd.s32 %s20, 1
      %s29 = sadd.s32 %s28, 1
      %p32 = scmp.eq.s32.totalorder %s20, 1
      %p33 = scmp.ne.s32.totalorder %s28, %s30
      %p34 = scmp.eq.s32.totalorder %s20, 0
      %p35 = por %p33, %p34
      %p36 = scmp.ne.s32.totalorder %s28, %s30
      %p37 = scmp.eq.s32.totalorder %s25, 1
      %p38 = por %p36, %p37
      %p39 = scmp.ne.s32.totalorder %s30, %s31
      %p40 = scmp.eq.s32.totalorder %s25, 0
      %p41 = por %p39, %p40
      %p42 = scmp.ne.s32.totalorder %s30, %s31
      %p43 = scmp.eq.s32.totalorder %s26, 1
      %p44 = por %p42, %p43
      %p46 = scmp.ne.s32.totalorder %s31, %s45
      %p47 = scmp.eq.s32.totalorder %s26, 0
      %p48 = por %p46, %p47
      %s49 = ssub.s32 %s20, %s27
      %p50 = scmp.eq.s32.totalorder %s49, 0
      %s52 = sadd.s32 %s51, 1
      %s53 = scalar_select %p50, %s51, %s52
      %p56 = pneg %p50
      %p57 = scmp.eq.s32.totalorder %s20, 1
      %p58 = por %p56, %p57
      %p59 = scmp.ne.s32.totalorder %s51, %s54
      %p60 = scmp.eq.s32.totalorder %s20, 0
      %p61 = por %p59, %p60
      %p62 = scmp.ne.s32.totalorder %s51, %s54
      %p63 = scmp.eq.s32.totalorder %s25, 1
      %p64 = por %p62, %p63
      %p65 = scmp.ne.s32.totalorder %s54, %s55
      %p66 = scmp.eq.s32.totalorder %s25, 0
      %p67 = por %p65, %p66
      %p68 = scmp.ne.s32.totalorder %s54, %s55
      %p69 = scmp.eq.s32.totalorder %s26, 1
      %p70 = por %p68, %p69
      %p72 = scmp.ne.s32.totalorder %s55, %s71
      %p73 = scmp.eq.s32.totalorder %s26, 0
      %p74 = por %p72, %p73
      %s75 = ssub.s32 %s20, %s27
      %p76 = scmp.eq.s32.totalorder %s75, 0
      %s78 = sadd.s32 %s77, 1
      %s79 = scalar_select %p76, %s77, %s78
      %p82 = pneg %p76
      %p83 = scmp.eq.s32.totalorder %s20, 1
      %p84 = por %p82, %p83
      %p85 = scmp.ne.s32.totalorder %s77, %s80
      %p86 = scmp.eq.s32.totalorder %s20, 0
      %p87 = por %p85, %p86
      %p88 = scmp.ne.s32.totalorder %s77, %s80
      %p89 = scmp.eq.s32.totalorder %s25, 1
      %p90 = por %p88, %p89
      %p91 = scmp.ne.s32.totalorder %s80, %s81
      %p92 = scmp.eq.s32.totalorder %s25, 0
      %p93 = por %p91, %p92
      %p94 = scmp.ne.s32.totalorder %s80, %s81
      %p95 = scmp.eq.s32.totalorder %s26, 1
      %p96 = por %p94, %p95
      %p98 = scmp.ne.s32.totalorder %s81, %s97
      %p99 = scmp.eq.s32.totalorder %s26, 0
      %p100 = por %p98, %p99
      %s101 = ssub.s32 %s20, %s27
      %p102 = scmp.eq.s32.totalorder %s101, 0
      %s104 = sadd.s32 %s103, 1
      %s105 = scalar_select %p102, %s103, %s104
      %p108 = pneg %p102
      %p109 = scmp.eq.s32.totalorder %s20, 1
      %p110 = por %p108, %p109
      %p111 = scmp.ne.s32.totalorder %s103, %s106
      %p112 = scmp.eq.s32.totalorder %s20, 0
      %p113 = por %p111, %p112
      %p114 = scmp.ne.s32.totalorder %s103, %s106
      %p115 = scmp.eq.s32.totalorder %s25, 1
      %p116 = por %p114, %p115
      %p117 = scmp.ne.s32.totalorder %s106, %s107
      %p118 = scmp.eq.s32.totalorder %s25, 0
      %p119 = por %p117, %p118
      %p120 = scmp.ne.s32.totalorder %s106, %s107
      %p121 = scmp.eq.s32.totalorder %s26, 1
      %p122 = por %p120, %p121
      %p124 = scmp.ne.s32.totalorder %s107, %s123
      %p125 = scmp.eq.s32.totalorder %s26, 0
      %p126 = por %p124, %p125
      %p127 = scmp.le.s32.totalorder 1, %s20
      %p128 = scmp.lt.s32.totalorder %s20, 3
      %p129 = pnand %p127, %p128
      %p130 = pneg %p129
      // Predicated region
      $region9: #{tpu_custom_call.1} parent=5 // pred_check
        _
      $region10: #{tpu_custom_call.1} parent=5 // pred_check_branch
        %132 = sbr.rel (%p129) target = $region12
      $region11: #{tpu_custom_call.1} parent=5 // pred_region
        %s133 = ssub.s32 %s20, 1
        // Predicated region
        $region13: #{tpu_custom_call.1} parent=11 // pred_check
          %p134 = pneg %p41
        $region14: #{tpu_custom_call.1} parent=11 // pred_check_branch
          %136 = sbr.rel (%p134) target = $region16
        $region15: #{tpu_custom_call.1} parent=11 // pred_region
          %s138 = ssub.s32 5120, 5120
          %139 = vsyncadd [#allocation3], %s138
          %s140 = sshll.u32 [#allocation2], 4
          %s141 = int_to_ptr.vmem [resolvable:$true] %s140
          %146 = dma.hbm_to_vmem [thread:$0]  %s0, 5120, %s141, [#allocation3], 64, 64, 4
        $region16: #{tpu_custom_call.1} parent=11 // pred_fallthru
          _
      $region12: #{tpu_custom_call.1} parent=5 // pred_fallthru
        _
      %p147 = scmp.lt.s32.totalorder %s20, 2
      // Predicated region
      $region17: #{tpu_custom_call.1} parent=5 // pred_check
        %p148 = pneg %p147
      $region18: #{tpu_custom_call.1} parent=5 // pred_check_branch
        %150 = sbr.rel (%p148) target = $region20
      $region19: #{tpu_custom_call.1} parent=5 // pred_region
        // Predicated region
        $region21: #{tpu_custom_call.1} parent=19 // pred_check
          %p151 = pneg %p61
        $region22: #{tpu_custom_call.1} parent=19 // pred_check_branch
          %153 = sbr.rel (%p151) target = $region24
        $region23: #{tpu_custom_call.1} parent=19 // pred_region
          %s154 = sand.u32 %s51, 1
          %s155 = scalar_lea.sflag [#allocation6], %s154
          %s156 = sand.u32 %s51, 1
          %s157 = smul.addr %s156, 40
          %s158 = scalar_lea.vmem [#allocation5], %s157
          %s159 = smul.u32 2, %s20
          %s161 = ssub.s32 640, 640
          %162 = vsyncadd %s155, %s161
          %s163 = smul.addr %s159, 5
          %s164 = smul.addr %s163, 64
          %s165 = scalar_lea.hbm %s1, %s164
          %s166 = sshll.u32 %s158, 4
          %s167 = int_to_ptr.vmem [resolvable:$true] %s166
          %172 = dma.hbm_to_vmem [thread:$0]  %s165, 640, %s167, %s155, 320, 320, 20
        $region24: #{tpu_custom_call.1} parent=19 // pred_fallthru
          _
      $region20: #{tpu_custom_call.1} parent=5 // pred_fallthru
        _
      %p173 = scmp.le.s32.totalorder 1, %s20
      %p174 = scmp.lt.s32.totalorder %s20, 3
      %p175 = pnand %p173, %p174
      %p176 = pneg %p175
      // Predicated region
      $region25: #{tpu_custom_call.1} parent=5 // pred_check
        _
      $region26: #{tpu_custom_call.1} parent=5 // pred_check_branch
        %178 = sbr.rel (%p175) target = $region28
      $region27: #{tpu_custom_call.1} parent=5 // pred_region
        %s179 = ssub.s32 %s20, 1
        // Predicated region
        $region29: #{tpu_custom_call.1} parent=27 // pred_check
          %p180 = pneg %p41
        $region30: #{tpu_custom_call.1} parent=27 // pred_check_branch
          %182 = sbr.rel (%p180) target = $region32
        $region31: #{tpu_custom_call.1} parent=27 // pred_region
          %183 = dma.done [#allocation3], 5120
        $region32: #{tpu_custom_call.1} parent=27 // pred_fallthru
          _
        %s184 = sand.u32 %s54, 1
        %s185 = scalar_lea.sflag [#allocation6], %s184
        %s186 = sand.u32 %s54, 1
        %s187 = smul.addr %s186, 40
        %s188 = scalar_lea.vmem [#allocation5], %s187
        // Predicated region
        $region33: #{tpu_custom_call.1} parent=27 // pred_check
          %p189 = pneg %p67
        $region34: #{tpu_custom_call.1} parent=27 // pred_check_branch
          %191 = sbr.rel (%p189) target = $region36
        $region35: #{tpu_custom_call.1} parent=27 // pred_region
          %192 = dma.done %s185, 640
        $region36: #{tpu_custom_call.1} parent=27 // pred_fallthru
          _
        %p193 = pneg %p41
        %p194 = pneg %p38
        %s195 = sand.u32 %s54, 1
        %s196 = scalar_lea.sflag [#allocation6], %s195
        %s197 = sand.u32 %s54, 1
        %s198 = smul.addr %s197, 40
        %s199 = scalar_lea.vmem [#allocation5], %s198
        %p200 = pneg %p67
        %p201 = pneg %p64
        %p202 = pneg %p93
        %p203 = pneg %p90
        %s204 = sand.u32 %s80, 1
        %s205 = scalar_lea.sflag [#allocation4], %s204
        %s206 = sand.u32 %s80, 1
        %s207 = smul.addr %s206, 8
        %s208 = scalar_lea.vmem [#allocation7], %s207
        %p209 = pneg %p119
        %p210 = pneg %p116
        %s211 = sand.u32 %s106, 1
        %s212 = scalar_lea.sflag [#allocation9], %s211
        %s213 = sand.u32 %s106, 1
        %s214 = smul.addr %s213, 8
        %s215 = scalar_lea.vmem [#allocation8], %s214
        %s216 = smul.u32 2, %s25
        %s217 = smul.u32 2, %s25
        %v219 = vld [vmem:[#allocation2] sm:$0xf]
        %v220 = vld [vmem:[#allocation2 + $0x4] sm:$0xf]
        %v221 = vld [vmem:[#allocation2 + $0x8] sm:$0xf]
        %v222 = vld [vmem:[#allocation2 + $0xc] sm:$0xf]
        %v223 = vld [vmem:[#allocation2 + $0x10] sm:$0xf]
        %v224 = vld [vmem:[#allocation2 + $0x14] sm:$0xf]
        %v225 = vld [vmem:[#allocation2 + $0x18] sm:$0xf]
        %v226 = vld [vmem:[#allocation2 + $0x1c] sm:$0xf]
        %v227 = vld [vmem:[#allocation2 + $0x20] sm:$0xf]
        %v228 = vld [vmem:[#allocation2 + $0x24] sm:$0xf]
        %v229 = vld [vmem:[#allocation2 + $0x28] sm:$0xf]
        %v230 = vld [vmem:[#allocation2 + $0x2c] sm:$0xf]
        %v231 = vld [vmem:[#allocation2 + $0x30] sm:$0xf]
        %v232 = vld [vmem:[#allocation2 + $0x34] sm:$0xf]
        %v233 = vld [vmem:[#allocation2 + $0x38] sm:$0xf]
        %v234 = vld [vmem:[#allocation2 + $0x3c] sm:$0xf]
        %v235 = vld [vmem:[#allocation2 + $0x40] sm:$0xf]
        %v236 = vld [vmem:[#allocation2 + $0x44] sm:$0xf]
        %v237 = vld [vmem:[#allocation2 + $0x48] sm:$0xf]
        %v238 = vld [vmem:[#allocation2 + $0x4c] sm:$0xf]
        %v239 = vld [vmem:[#allocation2 + $0x50] sm:$0xf]
        %v240 = vld [vmem:[#allocation2 + $0x54] sm:$0xf]
        %v241 = vld [vmem:[#allocation2 + $0x58] sm:$0xf]
        %v242 = vld [vmem:[#allocation2 + $0x5c] sm:$0xf]
        %v243 = vld [vmem:[#allocation2 + $0x60] sm:$0xf]
        %v244 = vld [vmem:[#allocation2 + $0x64] sm:$0xf]
        %v245 = vld [vmem:[#allocation2 + $0x68] sm:$0xf]
        %v246 = vld [vmem:[#allocation2 + $0x6c] sm:$0xf]
        %v247 = vld [vmem:[#allocation2 + $0x70] sm:$0xf]
        %v248 = vld [vmem:[#allocation2 + $0x74] sm:$0xf]
        %v249 = vld [vmem:[#allocation2 + $0x78] sm:$0xf]
        %v250 = vld [vmem:[#allocation2 + $0x7c] sm:$0xf]
        %v251 = vld [vmem:[#allocation2 + $0x80] sm:$0xf]
        %v252 = vld [vmem:[#allocation2 + $0x84] sm:$0xf]
        %v253 = vld [vmem:[#allocation2 + $0x88] sm:$0xf]
        %v254 = vld [vmem:[#allocation2 + $0x8c] sm:$0xf]
        %v255 = vld [vmem:[#allocation2 + $0x90] sm:$0xf]
        %v256 = vld [vmem:[#allocation2 + $0x94] sm:$0xf]
        %v257 = vld [vmem:[#allocation2 + $0x98] sm:$0xf]
        %v258 = vld [vmem:[#allocation2 + $0x9c] sm:$0xf]
        %v259 = vld [vmem:[#allocation2 + $0xa0] sm:$0xf]
        %v260 = vld [vmem:[#allocation2 + $0xa4] sm:$0xf]
        %v261 = vld [vmem:[#allocation2 + $0xa8] sm:$0xf]
        %v262 = vld [vmem:[#allocation2 + $0xac] sm:$0xf]
        %v263 = vld [vmem:[#allocation2 + $0xb0] sm:$0xf]
        %v264 = vld [vmem:[#allocation2 + $0xb4] sm:$0xf]
        %v265 = vld [vmem:[#allocation2 + $0xb8] sm:$0xf]
        %v266 = vld [vmem:[#allocation2 + $0xbc] sm:$0xf]
        %v267 = vld [vmem:[#allocation2 + $0xc0] sm:$0xf]
        %v268 = vld [vmem:[#allocation2 + $0xc4] sm:$0xf]
        %v269 = vld [vmem:[#allocation2 + $0xc8] sm:$0xf]
        %v270 = vld [vmem:[#allocation2 + $0xcc] sm:$0xf]
        %v271 = vld [vmem:[#allocation2 + $0xd0] sm:$0xf]
        %v272 = vld [vmem:[#allocation2 + $0xd4] sm:$0xf]
        %v273 = vld [vmem:[#allocation2 + $0xd8] sm:$0xf]
        %v274 = vld [vmem:[#allocation2 + $0xdc] sm:$0xf]
        %v275 = vld [vmem:[#allocation2 + $0xe0] sm:$0xf]
        %v276 = vld [vmem:[#allocation2 + $0xe4] sm:$0xf]
        %v277 = vld [vmem:[#allocation2 + $0xe8] sm:$0xf]
        %v278 = vld [vmem:[#allocation2 + $0xec] sm:$0xf]
        %v279 = vld [vmem:[#allocation2 + $0xf0] sm:$0xf]
        %v280 = vld [vmem:[#allocation2 + $0xf4] sm:$0xf]
        %v281 = vld [vmem:[#allocation2 + $0xf8] sm:$0xf]
        %v282 = vld [vmem:[#allocation2 + $0xfc] sm:$0xf]
        %v283 = vld [vmem:[#allocation2 + $0x100] sm:$0xf]
        %v284 = vld [vmem:[#allocation2 + $0x104] sm:$0xf]
        %v285 = vld [vmem:[#allocation2 + $0x108] sm:$0xf]
        %v286 = vld [vmem:[#allocation2 + $0x10c] sm:$0xf]
        %v287 = vld [vmem:[#allocation2 + $0x110] sm:$0xf]
        %v288 = vld [vmem:[#allocation2 + $0x114] sm:$0xf]
        %v289 = vld [vmem:[#allocation2 + $0x118] sm:$0xf]
        %v290 = vld [vmem:[#allocation2 + $0x11c] sm:$0xf]
        %v291 = vld [vmem:[#allocation2 + $0x120] sm:$0xf]
        %v292 = vld [vmem:[#allocation2 + $0x124] sm:$0xf]
        %v293 = vld [vmem:[#allocation2 + $0x128] sm:$0xf]
        %v294 = vld [vmem:[#allocation2 + $0x12c] sm:$0xf]
        %v295 = vld [vmem:[#allocation2 + $0x130] sm:$0xf]
        %v296 = vld [vmem:[#allocation2 + $0x134] sm:$0xf]
        %v297 = vld [vmem:[#allocation2 + $0x138] sm:$0xf]
        %v298 = vld [vmem:[#allocation2 + $0x13c] sm:$0xf]
        %v299 = vld [vmem:[%s188] sm:$0xff]
        %v300 = vld [vmem:[%s188 + $0x8] sm:$0xff]
        %v301 = vld [vmem:[%s188 + $0x10] sm:$0xf]
        %v302 = vld [vmem:[%s188 + $0x14] sm:$0xff]
        %v303 = vld [vmem:[%s188 + $0x1c] sm:$0xff]
        %v304 = vld [vmem:[%s188 + $0x24] sm:$0xf]
        %v305 = vmul.bf16 %v299, %v299
        %v306 = vmul.bf16 %v300, %v300
        %v307 = vmul.bf16 %v301, %v301
        %v308 = vmul.bf16 %v302, %v302
        %v309 = vmul.bf16 %v303, %v303
        %v310 = vmul.bf16 %v304, %v304
        %v317 = vunpack.c.l.b16 %v305
        %v318 = vunpack.c.h.b16 %v305
        %v319 = vunpack.c.l.b16 %v306
        %v320 = vunpack.c.h.b16 %v306
        %v321 = vunpack.c.l.b16 %v307
        %v322 = vunpack.c.l.b16 %v308
        %v323 = vunpack.c.h.b16 %v308
        %v324 = vunpack.c.l.b16 %v309
        %v325 = vunpack.c.h.b16 %v309
        %v326 = vunpack.c.l.b16 %v310
        %v327 = vpack.c.b16 %v322, %v317
        %v328 = vpack.c.b16 %v323, %v318
        %v329 = vpack.c.b16 %v324, %v319
        %v330 = vpack.c.b16 %v325, %v320
        %v331 = vpack.c.b16 %v326, %v321
        %v417 = vunpack.c.l.b16 %v219
        %v418 = vunpack.c.l.b16 %v220
        %v419 = vunpack.c.l.b16 %v221
        %v420 = vunpack.c.l.b16 %v222
        %v421 = vunpack.c.l.b16 %v223
        %v422 = vunpack.c.l.b16 %v224
        %v423 = vunpack.c.l.b16 %v225
        %v424 = vunpack.c.l.b16 %v226
        %v425 = vunpack.c.l.b16 %v227
        %v426 = vunpack.c.l.b16 %v228
        %v427 = vunpack.c.l.b16 %v229
        %v428 = vunpack.c.l.b16 %v230
        %v429 = vunpack.c.l.b16 %v231
        %v430 = vunpack.c.l.b16 %v232
        %v431 = vunpack.c.l.b16 %v233
        %v432 = vunpack.c.l.b16 %v234
        %v433 = vunpack.c.l.b16 %v235
        %v434 = vunpack.c.l.b16 %v236
        %v435 = vunpack.c.l.b16 %v237
        %v436 = vunpack.c.l.b16 %v238
        %v437 = vunpack.c.l.b16 %v239
        %v438 = vunpack.c.l.b16 %v240
        %v439 = vunpack.c.l.b16 %v241
        %v440 = vunpack.c.l.b16 %v242
        %v441 = vunpack.c.l.b16 %v243
        %v442 = vunpack.c.l.b16 %v244
        %v443 = vunpack.c.l.b16 %v245
        %v444 = vunpack.c.l.b16 %v246
        %v445 = vunpack.c.l.b16 %v247
        %v446 = vunpack.c.l.b16 %v248
        %v447 = vunpack.c.l.b16 %v249
        %v448 = vunpack.c.l.b16 %v250
        %v449 = vunpack.c.l.b16 %v251
        %v450 = vunpack.c.l.b16 %v252
        %v451 = vunpack.c.l.b16 %v253
        %v452 = vunpack.c.l.b16 %v254
        %v453 = vunpack.c.l.b16 %v255
        %v454 = vunpack.c.l.b16 %v256
        %v455 = vunpack.c.l.b16 %v257
        %v456 = vunpack.c.l.b16 %v258
        %v457 = vunpack.c.l.b16 %v259
        %v458 = vunpack.c.l.b16 %v260
        %v459 = vunpack.c.l.b16 %v261
        %v460 = vunpack.c.l.b16 %v262
        %v461 = vunpack.c.l.b16 %v263
        %v462 = vunpack.c.l.b16 %v264
        %v463 = vunpack.c.l.b16 %v265
        %v464 = vunpack.c.l.b16 %v266
        %v465 = vunpack.c.l.b16 %v267
        %v466 = vunpack.c.l.b16 %v268
        %v467 = vunpack.c.l.b16 %v269
        %v468 = vunpack.c.l.b16 %v270
        %v469 = vunpack.c.l.b16 %v271
        %v470 = vunpack.c.l.b16 %v272
        %v471 = vunpack.c.l.b16 %v273
        %v472 = vunpack.c.l.b16 %v274
        %v473 = vunpack.c.l.b16 %v275
        %v474 = vunpack.c.l.b16 %v276
        %v475 = vunpack.c.l.b16 %v277
        %v476 = vunpack.c.l.b16 %v278
        %v477 = vunpack.c.l.b16 %v279
        %v478 = vunpack.c.l.b16 %v280
        %v479 = vunpack.c.l.b16 %v281
        %v480 = vunpack.c.l.b16 %v282
        %v481 = vunpack.c.l.b16 %v283
        %v482 = vunpack.c.l.b16 %v284
        %v483 = vunpack.c.l.b16 %v285
        %v484 = vunpack.c.l.b16 %v286
        %v485 = vunpack.c.l.b16 %v287
        %v486 = vunpack.c.l.b16 %v288
        %v487 = vunpack.c.l.b16 %v289
        %v488 = vunpack.c.l.b16 %v290
        %v489 = vunpack.c.l.b16 %v291
        %v490 = vunpack.c.l.b16 %v292
        %v491 = vunpack.c.l.b16 %v293
        %v492 = vunpack.c.l.b16 %v294
        %v493 = vunpack.c.l.b16 %v295
        %v494 = vunpack.c.l.b16 %v296
        %v495 = vunpack.c.l.b16 %v297
        %v496 = vunpack.c.l.b16 %v298
        %v497 = vpack.c.b16 %v418, %v417
        %v498 = vpack.c.b16 %v420, %v419
        %v499 = vpack.c.b16 %v422, %v421
        %v500 = vpack.c.b16 %v424, %v423
        %v501 = vpack.c.b16 %v426, %v425
        %v502 = vpack.c.b16 %v428, %v427
        %v503 = vpack.c.b16 %v430, %v429
        %v504 = vpack.c.b16 %v432, %v431
        %v505 = vpack.c.b16 %v434, %v433
        %v506 = vpack.c.b16 %v436, %v435
        %v507 = vpack.c.b16 %v438, %v437
        %v508 = vpack.c.b16 %v440, %v439
        %v509 = vpack.c.b16 %v442, %v441
        %v510 = vpack.c.b16 %v444, %v443
        %v511 = vpack.c.b16 %v446, %v445
        %v512 = vpack.c.b16 %v448, %v447
        %v513 = vpack.c.b16 %v450, %v449
        %v514 = vpack.c.b16 %v452, %v451
        %v515 = vpack.c.b16 %v454, %v453
        %v516 = vpack.c.b16 %v456, %v455
        %v517 = vpack.c.b16 %v458, %v457
        %v518 = vpack.c.b16 %v460, %v459
        %v519 = vpack.c.b16 %v462, %v461
        %v520 = vpack.c.b16 %v464, %v463
        %v521 = vpack.c.b16 %v466, %v465
        %v522 = vpack.c.b16 %v468, %v467
        %v523 = vpack.c.b16 %v470, %v469
        %v524 = vpack.c.b16 %v472, %v471
        %v525 = vpack.c.b16 %v474, %v473
        %v526 = vpack.c.b16 %v476, %v475
        %v527 = vpack.c.b16 %v478, %v477
        %v528 = vpack.c.b16 %v480, %v479
        %v529 = vpack.c.b16 %v482, %v481
        %v530 = vpack.c.b16 %v484, %v483
        %v531 = vpack.c.b16 %v486, %v485
        %v532 = vpack.c.b16 %v488, %v487
        %v533 = vpack.c.b16 %v490, %v489
        %v534 = vpack.c.b16 %v492, %v491
        %v535 = vpack.c.b16 %v494, %v493
        %v536 = vpack.c.b16 %v496, %v495
        %577 = vmatprep.subr.bf16.mxu0 0
        %578 = vmatpush1.bf16.msra.mxu0 %v497
        %579 = vmatprep.subr.bf16.mxu0 0
        %580 = vmatpush1.bf16.msra.mxu0 %v498
        %581 = vmatprep.subr.bf16.mxu0 0
        %582 = vmatpush1.bf16.msra.mxu0 %v499
        %583 = vmatprep.subr.bf16.mxu0 0
        %584 = vmatpush1.bf16.msra.mxu0 %v500
        %585 = vmatprep.subr.bf16.mxu0 0
        %586 = vmatpush1.bf16.msra.mxu0 %v501
        %587 = vmatprep.subr.bf16.mxu0 0
        %588 = vmatpush1.bf16.msra.mxu0 %v502
        %589 = vmatprep.subr.bf16.mxu0 0
        %590 = vmatpush1.bf16.msra.mxu0 %v503
        %591 = vmatprep.subr.bf16.mxu0 0
        %592 = vmatpush1.bf16.msra.mxu0 %v504
        %593 = vmatprep.subr.bf16.mxu0 0
        %594 = vmatpush1.bf16.msra.mxu0 %v505
        %595 = vmatprep.subr.bf16.mxu0 0
        %596 = vmatpush1.bf16.msra.mxu0 %v506
        %597 = vmatprep.subr.bf16.mxu0 0
        %598 = vmatpush1.bf16.msra.mxu0 %v507
        %599 = vmatprep.subr.bf16.mxu0 0
        %600 = vmatpush1.bf16.msra.mxu0 %v508
        %601 = vmatprep.subr.bf16.mxu0 0
        %602 = vmatpush1.bf16.msra.mxu0 %v509
        %603 = vmatprep.subr.bf16.mxu0 0
        %604 = vmatpush1.bf16.msra.mxu0 %v510
        %605 = vmatprep.subr.bf16.mxu0 0
        %606 = vmatpush1.bf16.msra.mxu0 %v511
        %607 = vmatprep.subr.bf16.mxu0 0
        %608 = vmatpush1.bf16.msra.mxu0 %v512
        %609 = vmatprep.mubr.bf16.mxu0 %v328
        %610 = vmatmul.mubr.bf16.gmra.mrb[0].mxu0 %v327
        %v611 = vpop.f32.mrb[0].mxu0
        %v612 = vadd.f32 0.0, %v611
        %v613 = vpop.f32.mrb[0].mxu0
        %v614 = vpop.f32.mrb[0].mxu0
        %v615 = vadd.f32 0.0, %v614
        %v616 = vpop.f32.mrb[0].mxu0
        %617 = vdwg.mxu0
        %618 = vmatprep.subr.bf16.mxu0 0
        %619 = vmatpush1.bf16.msra.mxu0 %v513
        %620 = vmatprep.subr.bf16.mxu0 0
        %621 = vmatpush1.bf16.msra.mxu0 %v514
        %622 = vmatprep.subr.bf16.mxu0 0
        %623 = vmatpush1.bf16.msra.mxu0 %v515
        %624 = vmatprep.subr.bf16.mxu0 0
        %625 = vmatpush1.bf16.msra.mxu0 %v516
        %626 = vmatprep.subr.bf16.mxu0 0
        %627 = vmatpush1.bf16.msra.mxu0 %v517
        %628 = vmatprep.subr.bf16.mxu0 0
        %629 = vmatpush1.bf16.msra.mxu0 %v518
        %630 = vmatprep.subr.bf16.mxu0 0
        %631 = vmatpush1.bf16.msra.mxu0 %v519
        %632 = vmatprep.subr.bf16.mxu0 0
        %633 = vmatpush1.bf16.msra.mxu0 %v520
        %634 = vmatprep.subr.bf16.mxu0 0
        %635 = vmatpush1.bf16.msra.mxu0 %v521
        %636 = vmatprep.subr.bf16.mxu0 0
        %637 = vmatpush1.bf16.msra.mxu0 %v522
        %638 = vmatprep.subr.bf16.mxu0 0
        %639 = vmatpush1.bf16.msra.mxu0 %v523
        %640 = vmatprep.subr.bf16.mxu0 0
        %641 = vmatpush1.bf16.msra.mxu0 %v524
        %642 = vmatprep.subr.bf16.mxu0 0
        %643 = vmatpush1.bf16.msra.mxu0 %v525
        %644 = vmatprep.subr.bf16.mxu0 0
        %645 = vmatpush1.bf16.msra.mxu0 %v526
        %646 = vmatprep.subr.bf16.mxu0 0
        %647 = vmatpush1.bf16.msra.mxu0 %v527
        %648 = vmatprep.subr.bf16.mxu0 0
        %649 = vmatpush1.bf16.msra.mxu0 %v528
        %650 = vmatprep.mubr.bf16.mxu0 %v330
        %651 = vmatmul.mubr.bf16.gmra.mrb[0].mxu0 %v329
        %v652 = vpop.f32.mrb[0].mxu0
        %v653 = vadd.f32 %v612, %v652
        %v654 = vpop.f32.mrb[0].mxu0
        %v655 = vpop.f32.mrb[0].mxu0
        %v656 = vadd.f32 %v615, %v655
        %v657 = vpop.f32.mrb[0].mxu0
        %658 = vdwg.mxu0
        %659 = vmatprep.subr.bf16.mxu0 0
        %660 = vmatpush1.bf16.msra.mxu0 %v529
        %661 = vmatprep.subr.bf16.mxu0 0
        %662 = vmatpush1.bf16.msra.mxu0 %v530
        %663 = vmatprep.subr.bf16.mxu0 0
        %664 = vmatpush1.bf16.msra.mxu0 %v531
        %665 = vmatprep.subr.bf16.mxu0 0
        %666 = vmatpush1.bf16.msra.mxu0 %v532
        %667 = vmatprep.subr.bf16.mxu0 0
        %668 = vmatpush1.bf16.msra.mxu0 %v533
        %669 = vmatprep.subr.bf16.mxu0 0
        %670 = vmatpush1.bf16.msra.mxu0 %v534
        %671 = vmatprep.subr.bf16.mxu0 0
        %672 = vmatpush1.bf16.msra.mxu0 %v535
        %673 = vmatprep.subr.bf16.mxu0 0
        %674 = vmatpush1.bf16.msra.mxu0 %v536
        %675 = vmatprep.subr.bf16.mxu0 0
        %676 = vmatpush1.bf16.msra.mxu0 0
        %677 = vmatprep.subr.bf16.mxu0 0
        %678 = vmatpush1.bf16.msra.mxu0 0
        %679 = vmatprep.subr.bf16.mxu0 0
        %680 = vmatpush1.bf16.msra.mxu0 0
        %681 = vmatprep.subr.bf16.mxu0 0
        %682 = vmatpush1.bf16.msra.mxu0 0
        %683 = vmatprep.subr.bf16.mxu0 0
        %684 = vmatpush1.bf16.msra.mxu0 0
        %685 = vmatprep.subr.bf16.mxu0 0
        %686 = vmatpush1.bf16.msra.mxu0 0
        %687 = vmatprep.subr.bf16.mxu0 0
        %688 = vmatpush1.bf16.msra.mxu0 0
        %689 = vmatprep.subr.bf16.mxu0 0
        %690 = vmatpush1.bf16.msra.mxu0 0
        %691 = vmatprep.mubr.bf16.mxu0 0
        %692 = vmatmul.mubr.bf16.gmra.mrb[0].mxu0 %v331
        %v693 = vpop.f32.mrb[0].mxu0
        %v694 = vadd.f32 %v653, %v693
        %v695 = vpop.f32.mrb[0].mxu0
        %v696 = vpop.f32.mrb[0].mxu0
        %v697 = vadd.f32 %v656, %v696
        %v698 = vpop.f32.mrb[0].mxu0
        %699 = vdwg.mxu0
        %v702 = vunpack.c.l.b16 %v299
        %v703 = vunpack.c.l.b16 %v302
        %v704 = vpack.c.b16 %v703, %v702
        %705 = vrot.lane.b32.xlu0 %v704, 64
        %v706 = vpop.permute.xlu0 %705
        %vm707 = vcmask 523264
        %v710 = vsel %vm707, %v704, %v706
        %v712 = vunpack.c.l.b16 %v710
        %v713 = vunpack.c.h.b16 %v710
        %v714 = vpack.c.b16 %v712, %v712
        %v715 = vpack.c.b16 %v713, %v713
        %v718 = vmul.bf16 %v299, %v714
        %v719 = vmul.bf16 %v300, %v714
        %v720 = vmul.bf16 %v301, %v714
        %v721 = vmul.bf16 %v302, %v715
        %v722 = vmul.bf16 %v303, %v715
        %v723 = vmul.bf16 %v304, %v715
        %v730 = vunpack.c.l.b16 %v718
        %v731 = vunpack.c.h.b16 %v718
        %v732 = vunpack.c.l.b16 %v719
        %v733 = vunpack.c.h.b16 %v719
        %v734 = vunpack.c.l.b16 %v720
        %v735 = vunpack.c.l.b16 %v721
        %v736 = vunpack.c.h.b16 %v721
        %v737 = vunpack.c.l.b16 %v722
        %v738 = vunpack.c.h.b16 %v722
        %v739 = vunpack.c.l.b16 %v723
        %v740 = vpack.c.b16 %v735, %v730
        %v741 = vpack.c.b16 %v736, %v731
        %v742 = vpack.c.b16 %v737, %v732
        %v743 = vpack.c.b16 %v738, %v733
        %v744 = vpack.c.b16 %v739, %v734
        %750 = vmatprep.subr.bf16.mxu0 0
        %751 = vmatpush1.bf16.msra.mxu0 %v497
        %752 = vmatprep.subr.bf16.mxu0 0
        %753 = vmatpush1.bf16.msra.mxu0 %v498
        %754 = vmatprep.subr.bf16.mxu0 0
        %755 = vmatpush1.bf16.msra.mxu0 %v499
        %756 = vmatprep.subr.bf16.mxu0 0
        %757 = vmatpush1.bf16.msra.mxu0 %v500
        %758 = vmatprep.subr.bf16.mxu0 0
        %759 = vmatpush1.bf16.msra.mxu0 %v501
        %760 = vmatprep.subr.bf16.mxu0 0
        %761 = vmatpush1.bf16.msra.mxu0 %v502
        %762 = vmatprep.subr.bf16.mxu0 0
        %763 = vmatpush1.bf16.msra.mxu0 %v503
        %764 = vmatprep.subr.bf16.mxu0 0
        %765 = vmatpush1.bf16.msra.mxu0 %v504
        %766 = vmatprep.subr.bf16.mxu0 0
        %767 = vmatpush1.bf16.msra.mxu0 %v505
        %768 = vmatprep.subr.bf16.mxu0 0
        %769 = vmatpush1.bf16.msra.mxu0 %v506
        %770 = vmatprep.subr.bf16.mxu0 0
        %771 = vmatpush1.bf16.msra.mxu0 %v507
        %772 = vmatprep.subr.bf16.mxu0 0
        %773 = vmatpush1.bf16.msra.mxu0 %v508
        %774 = vmatprep.subr.bf16.mxu0 0
        %775 = vmatpush1.bf16.msra.mxu0 %v509
        %776 = vmatprep.subr.bf16.mxu0 0
        %777 = vmatpush1.bf16.msra.mxu0 %v510
        %778 = vmatprep.subr.bf16.mxu0 0
        %779 = vmatpush1.bf16.msra.mxu0 %v511
        %780 = vmatprep.subr.bf16.mxu0 0
        %781 = vmatpush1.bf16.msra.mxu0 %v512
        %782 = vmatprep.mubr.bf16.mxu0 %v741
        %783 = vmatmul.mubr.bf16.gmra.mrb[0].mxu0 %v740
        %v784 = vpop.f32.mrb[0].mxu0
        %v785 = vadd.f32 0.0, %v784
        %v786 = vpop.f32.mrb[0].mxu0
        %v787 = vpop.f32.mrb[0].mxu0
        %v788 = vadd.f32 0.0, %v787
        %v789 = vpop.f32.mrb[0].mxu0
        %790 = vdwg.mxu0
        %791 = vmatprep.subr.bf16.mxu0 0
        %792 = vmatpush1.bf16.msra.mxu0 %v513
        %793 = vmatprep.subr.bf16.mxu0 0
        %794 = vmatpush1.bf16.msra.mxu0 %v514
        %795 = vmatprep.subr.bf16.mxu0 0
        %796 = vmatpush1.bf16.msra.mxu0 %v515
        %797 = vmatprep.subr.bf16.mxu0 0
        %798 = vmatpush1.bf16.msra.mxu0 %v516
        %799 = vmatprep.subr.bf16.mxu0 0
        %800 = vmatpush1.bf16.msra.mxu0 %v517
        %801 = vmatprep.subr.bf16.mxu0 0
        %802 = vmatpush1.bf16.msra.mxu0 %v518
        %803 = vmatprep.subr.bf16.mxu0 0
        %804 = vmatpush1.bf16.msra.mxu0 %v519
        %805 = vmatprep.subr.bf16.mxu0 0
        %806 = vmatpush1.bf16.msra.mxu0 %v520
        %807 = vmatprep.subr.bf16.mxu0 0
        %808 = vmatpush1.bf16.msra.mxu0 %v521
        %809 = vmatprep.subr.bf16.mxu0 0
        %810 = vmatpush1.bf16.msra.mxu0 %v522
        %811 = vmatprep.subr.bf16.mxu0 0
        %812 = vmatpush1.bf16.msra.mxu0 %v523
        %813 = vmatprep.subr.bf16.mxu0 0
        %814 = vmatpush1.bf16.msra.mxu0 %v524
        %815 = vmatprep.subr.bf16.mxu0 0
        %816 = vmatpush1.bf16.msra.mxu0 %v525
        %817 = vmatprep.subr.bf16.mxu0 0
        %818 = vmatpush1.bf16.msra.mxu0 %v526
        %819 = vmatprep.subr.bf16.mxu0 0
        %820 = vmatpush1.bf16.msra.mxu0 %v527
        %821 = vmatprep.subr.bf16.mxu0 0
        %822 = vmatpush1.bf16.msra.mxu0 %v528
        %823 = vmatprep.mubr.bf16.mxu0 %v743
        %824 = vmatmul.mubr.bf16.gmra.mrb[0].mxu0 %v742
        %v825 = vpop.f32.mrb[0].mxu0
        %v826 = vadd.f32 %v785, %v825
        %v827 = vpop.f32.mrb[0].mxu0
        %v828 = vpop.f32.mrb[0].mxu0
        %v829 = vadd.f32 %v788, %v828
        %v830 = vpop.f32.mrb[0].mxu0
        %831 = vdwg.mxu0
        %832 = vmatprep.subr.bf16.mxu0 0
        %833 = vmatpush1.bf16.msra.mxu0 %v529
        %834 = vmatprep.subr.bf16.mxu0 0
        %835 = vmatpush1.bf16.msra.mxu0 %v530
        %836 = vmatprep.subr.bf16.mxu0 0
        %837 = vmatpush1.bf16.msra.mxu0 %v531
        %838 = vmatprep.subr.bf16.mxu0 0
        %839 = vmatpush1.bf16.msra.mxu0 %v532
        %840 = vmatprep.subr.bf16.mxu0 0
        %841 = vmatpush1.bf16.msra.mxu0 %v533
        %842 = vmatprep.subr.bf16.mxu0 0
        %843 = vmatpush1.bf16.msra.mxu0 %v534
        %844 = vmatprep.subr.bf16.mxu0 0
        %845 = vmatpush1.bf16.msra.mxu0 %v535
        %846 = vmatprep.subr.bf16.mxu0 0
        %847 = vmatpush1.bf16.msra.mxu0 %v536
        %848 = vmatprep.subr.bf16.mxu0 0
        %849 = vmatpush1.bf16.msra.mxu0 0
        %850 = vmatprep.subr.bf16.mxu0 0
        %851 = vmatpush1.bf16.msra.mxu0 0
        %852 = vmatprep.subr.bf16.mxu0 0
        %853 = vmatpush1.bf16.msra.mxu0 0
        %854 = vmatprep.subr.bf16.mxu0 0
        %855 = vmatpush1.bf16.msra.mxu0 0
        %856 = vmatprep.subr.bf16.mxu0 0
        %857 = vmatpush1.bf16.msra.mxu0 0
        %858 = vmatprep.subr.bf16.mxu0 0
        %859 = vmatpush1.bf16.msra.mxu0 0
        %860 = vmatprep.subr.bf16.mxu0 0
        %861 = vmatpush1.bf16.msra.mxu0 0
        %862 = vmatprep.subr.bf16.mxu0 0
        %863 = vmatpush1.bf16.msra.mxu0 0
        %864 = vmatprep.mubr.bf16.mxu0 0
        %865 = vmatmul.mubr.bf16.gmra.mrb[0].mxu0 %v744
        %v866 = vpop.f32.mrb[0].mxu0
        %v867 = vadd.f32 %v826, %v866
        %v868 = vpop.f32.mrb[0].mxu0
        %v869 = vpop.f32.mrb[0].mxu0
        %v870 = vadd.f32 %v829, %v869
        %v871 = vpop.f32.mrb[0].mxu0
        %872 = vdwg.mxu0
        %s873 = smul.u32 %s25, 16
        %v874 = vlaneseq
        %v875 = vshrl.u32 %v874, 7
        %v876 = vadd.s32 %v875, 8
        %v877 = vstv %s873
        %v878 = vadd.s32 %v877, %v875
        %v879 = vadd.s32 %v877, %v876
        %vm880 = vcmp.lt.s32.totalorder %v878, 8
        %vm881 = vcmp.lt.s32.totalorder %v879, 8
        %v882 = vsel %vm880, 1, 0
        %v883 = vsel %vm881, 1, 0
        %v884 = vcvt.s32.f32 %v882
        %v885 = vcvt.s32.f32 %v883
        %v886 = vmul.f32 %v694, %v884
        %v887 = vmul.f32 %v697, %v885
        %v888 = vadd.f32 %v886, %v887
        %889 = vadd.xlane.f32.xlu0 %v888
        %v890 = vpop.xlane.xlu0 %889
        %v891 = vrot.slane %v890, 4
        %v892 = vadd.f32 %v890, %v891
        %v893 = vrot.slane %v892, 2
        %v894 = vadd.f32 %v892, %v893
        %v895 = vrot.slane %v894, 1
        %v896 = vadd.f32 %v894, %v895
        %s897 = vtos %v896
        %s898 = smul.f32 %s897, 0.5
        %v899 = vmax.f32 %v694, 1e-24
        %v900 = vmax.f32 %v697, 1e-24
        %v901 = vrsqrt.pop %v899
        %v902 = vrsqrt.pop %v900
        %v903 = vmul.f32 %v867, %v901
        %v904 = vmul.f32 %v870, %v902
        %906 = vset.pattern.permute.xlu0 0
        %907 = vperm.xlu0 %906, %v901
        %v908 = vpop.permute.xlu0 %907
        %911 = vset.pattern.permute.xlu0 0
        %912 = vperm.xlu0 %911, %v902
        %v913 = vpop.permute.xlu0 %912
        %v915 = vmul.f32 %v903, %v908
        %v916 = vmul.f32 %v904, %v913
        %v917 = vpack.c.bf16 %v916, %v915
        %v919 = vunpack.c.l.b16 %v917
        %v920 = vunpack.c.h.b16 %v917
        %v921 = vpack.c.b16 %v919, %v919
        %v922 = vpack.c.b16 %v920, %v920
        %925 = vst [vmem:[%s208] sm:$0xf] %v921
        %926 = vst [vmem:[%s208 + $0x4] sm:$0xf] %v922
        %v927 = vlaneseq
        %v928 = vand.u32 %v927, 127
        %vm929 = vcmp.ge.s32.totalorder %v928, 1
        %vm930 = vcmp.le.s32.totalorder %v928, 9
        %vm931 = vmand %vm929, %vm930
        %v932 = vmul.f32 %v915, 10.0
        %v933 = vmul.f32 %v916, 10.0
        %v934 = vsel %vm931, %v932, -1e+30
        %v935 = vsel %vm931, %v933, -1e+30
        %936 = vmax.xlane.f32.xlu0 %v934
        %v937 = vpop.xlane.xlu0 %936
        %938 = vmax.xlane.f32.xlu0 %v935
        %v939 = vpop.xlane.xlu0 %938
        %v940 = vsub.f32 %v934, %v937
        %v941 = vsub.f32 %v935, %v939
        %v942 = vmul.f32 %v940, 1.442695
        %v943 = vpow.pop %v942
        %v944 = vmul.f32 %v941, 1.442695
        %v945 = vpow.pop %v944
        %946 = vadd.xlane.f32.xlu0 %v943
        %v947 = vpop.xlane.xlu0 %946
        %948 = vadd.xlane.f32.xlu0 %v945
        %v949 = vpop.xlane.xlu0 %948
        %v950 = vlog2.pop %v947
        %v951 = vmul.f32 %v950, 0.6931472
        %v952 = vlog2.pop %v949
        %v953 = vmul.f32 %v952, 0.6931472
        %v954 = vadd.f32 %v937, %v951
        %v955 = vadd.f32 %v939, %v953
        %v956 = vsub.f32 %v954, %v934
        %v957 = vsub.f32 %v955, %v935
        %v958 = vmul.f32 %v956, %v884
        %v959 = vmul.f32 %v957, %v885
        %962 = vrot.lane.b32.xlu0 %v958, 127
        %v963 = vpop.permute.xlu0 %962
        %964 = vrot.lane.b32.xlu0 %v959, 127
        %v965 = vpop.permute.xlu0 %964
        %vm968 = vcmask 7168
        %v969 = vsel %vm968, %v963, 0.0
        %v970 = vsel %vm968, %v965, 0.0
        %v971 = vadd.f32 %v969, %v970
        %972 = vadd.xlane.f32.xlu0 %v971
        %v973 = vpop.xlane.xlu0 %972
        %v974 = vrot.slane %v973, 4
        %v975 = vadd.f32 %v973, %v974
        %v976 = vrot.slane %v975, 2
        %v977 = vadd.f32 %v975, %v976
        %v978 = vrot.slane %v977, 1
        %v979 = vadd.f32 %v977, %v978
        %s980 = vtos %v979
        %vm981 = vcmp.eq.s32.totalorder %v928, 0
        %vm982 = vcmp.eq.s32.totalorder %v928, 1
        %v983 = vstv %s980
        %v984 = vsel %vm982, %v983, 0.0
        %v985 = vstv %s898
        %v986 = vsel %vm981, %v985, %v984
        %987 = vst [vmem:[%s215] sm:$0xff] %v986
        %s988 = sand.u32 %s80, 1
        %s989 = scalar_lea.sflag [#allocation4], %s988
        %s990 = sand.u32 %s80, 1
        %s991 = smul.addr %s990, 8
        %s992 = scalar_lea.vmem [#allocation7], %s991
        %s993 = sand.u32 %s106, 1
        %s994 = scalar_lea.sflag [#allocation9], %s993
        %s995 = sand.u32 %s106, 1
        %s996 = smul.addr %s995, 8
        %s997 = scalar_lea.vmem [#allocation8], %s996
        // Predicated region
        $region37: #{tpu_custom_call.1} parent=27 // pred_check
          %p998 = pneg %p90
        $region38: #{tpu_custom_call.1} parent=27 // pred_check_branch
          %1000 = sbr.rel (%p998) target = $region40
        $region39: #{tpu_custom_call.1} parent=27 // pred_region
          %s1001 = smul.u32 2, %s25
          %s1003 = ssub.s32 128, 128
          %1004 = vsyncadd %s989, %s1003
          %s1005 = smul.addr %s1001, 64
          %s1006 = scalar_lea.hbm %s2, %s1005
          %s1007 = sshll.u32 %s992, 4
          %s1008 = int_to_ptr.vmem [resolvable:$true] %s1007
          %1013 = dma.vmem_to_hbm [thread:$0]  %s1008, 128, %s1006, %s989, 64, 64, 4
        $region40: #{tpu_custom_call.1} parent=27 // pred_fallthru
          _
        // Predicated region
        $region41: #{tpu_custom_call.1} parent=27 // pred_check
          %p1014 = pneg %p116
        $region42: #{tpu_custom_call.1} parent=27 // pred_check_branch
          %1016 = sbr.rel (%p1014) target = $region44
        $region43: #{tpu_custom_call.1} parent=27 // pred_region
          %s1018 = ssub.s32 128, 128
          %1019 = vsyncadd %s994, %s1018
          %s1020 = smul.addr %s25, 128
          %s1021 = scalar_lea.hbm %s3, %s1020
          %s1023 = sshll.u32 %s997, 4
          %s1024 = int_to_ptr.vmem [resolvable:$true] %s1023
          %1026 = dma.vmem_to_hbm [thread:$0]  %s1024, 128, %s1021, %s994
        $region44: #{tpu_custom_call.1} parent=27 // pred_fallthru
          _
      $region28: #{tpu_custom_call.1} parent=5 // pred_fallthru
        _
      %p1027 = scmp.le.s32.totalorder 2, %s20
      // Predicated region
      $region45: #{tpu_custom_call.1} parent=5 // pred_check
        %p1028 = pneg %p1027
      $region46: #{tpu_custom_call.1} parent=5 // pred_check_branch
        %1030 = sbr.rel (%p1028) target = $region48
      $region47: #{tpu_custom_call.1} parent=5 // pred_region
        %s1031 = ssub.s32 %s20, 2
        // Predicated region
        $region49: #{tpu_custom_call.1} parent=47 // pred_check
          %p1032 = pneg %p96
        $region50: #{tpu_custom_call.1} parent=47 // pred_check_branch
          %1034 = sbr.rel (%p1032) target = $region52
        $region51: #{tpu_custom_call.1} parent=47 // pred_region
          %s1035 = sand.u32 %s81, 1
          %s1036 = scalar_lea.sflag [#allocation4], %s1035
          %s1037 = sand.u32 %s81, 1
          %s1038 = smul.addr %s1037, 8
          %s1039 = scalar_lea.vmem [#allocation7], %s1038
          %1040 = dma.done %s1036, 128
        $region52: #{tpu_custom_call.1} parent=47 // pred_fallthru
          _
        // Predicated region
        $region53: #{tpu_custom_call.1} parent=47 // pred_check
          %p1041 = pneg %p122
        $region54: #{tpu_custom_call.1} parent=47 // pred_check_branch
          %1043 = sbr.rel (%p1041) target = $region56
        $region55: #{tpu_custom_call.1} parent=47 // pred_region
          %s1044 = sand.u32 %s107, 1
          %s1045 = scalar_lea.sflag [#allocation9], %s1044
          %s1046 = sand.u32 %s107, 1
          %s1047 = smul.addr %s1046, 8
          %s1048 = scalar_lea.vmem [#allocation8], %s1047
          %1049 = dma.done %s1045, 128
        $region56: #{tpu_custom_call.1} parent=47 // pred_fallthru
          _
      $region48: #{tpu_custom_call.1} parent=5 // pred_fallthru
        _
    $region6: #{tpu_custom_call.1} parent=1 // loop_footer
      %s24 = sadd.s32 1, %s20
    $region7: #{tpu_custom_call.1} parent=1 // loop_footer_branch
      %19 = sbr.rel target = $region3
    $region8: #{tpu_custom_call.1} parent=1 // loop_exit
      _
    %1050 = vsyncpa [#allocation3], 1
    %s1051 = scalar_lea.sflag [#allocation3], 1
    %1052 = vsyncpa %s1051, 1
    %1053 = vsyncpa [#allocation6], 1
    %s1054 = scalar_lea.sflag [#allocation6], 1
    %1055 = vsyncpa %s1054, 1
    %1056 = vsyncpa [#allocation4], 1
    %s1057 = scalar_lea.sflag [#allocation4], 1
    %1058 = vsyncpa %s1057, 1
    %1059 = vsyncpa [#allocation9], 1
    %s1060 = scalar_lea.sflag [#allocation9], 1
    %1061 = vsyncpa %s1060, 1

</llo_original>
